<compile_context>
chip_gen: v7x
topology: tpu7x:2x2x1
jax: 0.10.0
libtpu: 0.0.40
codegen_flags: <defaults>
</compile_context>

<pallas_src>
import jax
import jax.numpy as jnp
from jax.experimental import pallas as pl
from jax.experimental.pallas import tpu as pltpu


def _round_up(x, m):
    return ((x + m - 1) // m) * m


def _mlp_head_kernel(x_ref, w_ref, b_ref, o_ref):
    # x_ref: (C_in, tl) input dtype   w_ref: (C_out, C_in) bf16
    # b_ref: (C_out, 1) f32           o_ref: (C_out, tl)
    x = x_ref[...].astype(jnp.bfloat16)          # single tile-wide cast
    acc = jnp.dot(w_ref[...], x, preferred_element_type=jnp.float32)
    acc = acc + b_ref[...]                       # bias broadcast over lanes (L)
    o_ref[...] = jnp.maximum(acc, 0.0).astype(o_ref.dtype)


def mlp_head_forward(x_ncl, weight, bias, *, tl=512):
    """relu(Conv1d(k=1)(x) + bias) in NCL layout.

    x_ncl:  (B, C_in, L)
    weight: (C_out, C_in)   (Conv1d weight with the k=1 axis squeezed)
    bias:   (C_out,)
    returns (B, C_out, L), same dtype as x_ncl.
    """
    B, C_in, L = x_ncl.shape
    C_out = weight.shape[0]

    # ---- choose the lane (L) tile --------------------------------------
    if L >= tl:
        tile = tl                                # tl is a multiple of 128
    elif L > 128:
        tile = _round_up(L, 128)                 # one lane-dense tile
    else:
        tile = L                                 # tiny L: single (masked) tile
    L_pad = _round_up(L, tile)
    if L_pad != L:
        x_ncl = jnp.pad(x_ncl, ((0, 0), (0, 0), (0, L_pad - L)))

    w_bf16 = weight.astype(jnp.bfloat16)         # small, VMEM-resident
    b2d = bias.astype(jnp.float32).reshape(C_out, 1)

    grid = (B, L_pad // tile)

    # ---- VMEM budget (2x-buffered x/out tiles + resident W and bias) ---
    itm = x_ncl.dtype.itemsize
    x_tile_b = C_in * tile * itm
    o_tile_b = C_out * tile * itm
    w_b = C_out * max(C_in, 128) * 2
    b_b = max(C_out, 8) * 128 * 4
    need = 2 * (x_tile_b + o_tile_b) + 2 * (w_b + b_b)
    vmem_limit = int(min(max(2 * need, 32 * 1024 * 1024), 48 * 1024 * 1024))

    cost = pl.CostEstimate(
        flops=2 * B * L_pad * C_in * C_out,
        transcendentals=0,
        bytes_accessed=(B * C_in * L_pad * itm
                        + B * C_out * L_pad * itm
                        + C_out * C_in * 2 + C_out * 4),
    )

    # TODO(synk): add a K grid axis with an f32 VMEM accumulator for very
    # large C_in/C_out (the weight is currently fully VMEM-resident).
    out = pl.pallas_call(
        _mlp_head_kernel,
        out_shape=jax.ShapeDtypeStruct((B, C_out, L_pad), x_ncl.dtype),
        grid=grid,
        in_specs=[
            pl.BlockSpec((None, C_in, tile), lambda b, l: (b, 0, l)),
            pl.BlockSpec((C_out, C_in), lambda b, l: (0, 0)),
            pl.BlockSpec((C_out, 1), lambda b, l: (0, 0)),
        ],
        out_specs=pl.BlockSpec((None, C_out, tile), lambda b, l: (b, 0, l)),
        compiler_params=pltpu.CompilerParams(
            dimension_semantics=("parallel", "parallel"),
            vmem_limit_bytes=vmem_limit,
        ),
        cost_estimate=cost,
    )(x_ncl, w_bf16, b2d)

    if L_pad != L:
        out = out[:, :, :L]
    return out


if __name__ == "__main__":
    key = jax.random.PRNGKey(0)

    def run_case(B, in_sz, out_sz, L):
        kx, kw, kb = jax.random.split(jax.random.fold_in(key, L), 3)
        x = jax.random.normal(kx, (B, in_sz, L), dtype=jnp.float32)
        # Conv1d weight is (out, in, 1) -> squeeze the kernel axis.
        weight = jax.random.normal(kw, (out_sz, in_sz), dtype=jnp.float32) * 0.1
        bias = jax.random.normal(kb, (out_sz,), dtype=jnp.float32) * 0.1

        out = jax.block_until_ready(mlp_head_forward(x, weight, bias))

        ref = jax.nn.relu(
            jnp.einsum("bil,oi->bol", x, weight) + bias[None, :, None])
        assert out.shape == (B, out_sz, L)
        # bf16 MXU inputs -> loosened tolerance vs the f32 reference.
        assert jnp.allclose(out, ref, atol=2e-2, rtol=2e-2), (
            float(jnp.max(jnp.abs(out - ref))))

    # Small shapes consistent with the module (NCL Conv1d input).
    run_case(B=2, in_sz=32, out_sz=64, L=16)
    # Exercise the padded / lane-dense L-tile path.
    run_case(B=2, in_sz=32, out_sz=64, L=300)

    print("KERNEL_OK")
</pallas_src>

<mosaic_0001>
module attributes {stable_mosaic.version = 11 : i64} {
  func.func @_mlp_head_kernel(%arg0: i32, %arg1: i32, %arg2: memref<1x32x16xf32, #tpu.memory_space<vmem>>, %arg3: memref<64x32xbf16, #tpu.memory_space<vmem>>, %arg4: memref<64x1xf32, #tpu.memory_space<vmem>>, %arg5: memref<1x64x16xf32, #tpu.memory_space<vmem>>) attributes {dimension_semantics = [#tpu.dimension_semantics<parallel>, #tpu.dimension_semantics<parallel>], iteration_bounds = array<i64: 2, 1>, scalar_prefetch = 0 : i64, scratch_operands = 0 : i64, tpu.core_type = #tpu.core_type<tc>, window_params = [{transform_indices = @transform_0, window_bounds = array<i64: 1, 32, 16>}, {pipeline_mode = #tpu.pipeline_mode<synchronous>, transform_indices = @transform_1, window_bounds = array<i64: 64, 32>}, {pipeline_mode = #tpu.pipeline_mode<synchronous>, transform_indices = @transform_2, window_bounds = array<i64: 64, 1>}, {transform_indices = @transform_3, window_bounds = array<i64: 1, 64, 16>}]} {
    %c0 = arith.constant 0 : index
    %c0_0 = arith.constant 0 : index
    %c0_1 = arith.constant 0 : index
    %0 = vector.load %arg2[%c0, %c0_0, %c0_1] : memref<1x32x16xf32, #tpu.memory_space<vmem>>, vector<1x32x16xf32>
    %1 = vector.shape_cast %0 : vector<1x32x16xf32> to vector<32x16xf32>
    %2 = arith.truncf %1 : vector<32x16xf32> to vector<32x16xbf16>
    %c0_2 = arith.constant 0 : index
    %c0_3 = arith.constant 0 : index
    %3 = vector.load %arg3[%c0_2, %c0_3] : memref<64x32xbf16, #tpu.memory_space<vmem>>, vector<64x32xbf16>
    %cst = arith.constant dense<0.000000e+00> : vector<64x16xf32>
    %4 = tpu.matmul %3, %2, %cst {dimension_numbers = #tpu.dot_dimension_numbers<[1], [0], [0], [1], [0, 0, 1, 1], [], []>} : vector<64x32xbf16>, vector<32x16xbf16>, vector<64x16xf32> -> vector<64x16xf32>
    %c0_4 = arith.constant 0 : index
    %c0_5 = arith.constant 0 : index
    %5 = vector.load %arg4[%c0_4, %c0_5] : memref<64x1xf32, #tpu.memory_space<vmem>>, vector<64x1xf32>
    %6 = vector.broadcast %5 : vector<64x1xf32> to vector<64x16xf32>
    %7 = arith.addf %4, %6 : vector<64x16xf32>
    %cst_6 = arith.constant 0.000000e+00 : f32
    %8 = vector.broadcast %cst_6 : f32 to vector<64x16xf32>
    %9 = arith.maximumf %7, %8 : vector<64x16xf32>
    %c0_7 = arith.constant 0 : index
    %c0_8 = arith.constant 0 : index
    %c0_9 = arith.constant 0 : index
    %10 = vector.load %arg5[%c0_7, %c0_8, %c0_9] : memref<1x64x16xf32, #tpu.memory_space<vmem>>, vector<1x64x16xf32>
    %11 = vector.shape_cast %10 : vector<1x64x16xf32> to vector<64x16xf32>
    %12 = vector.shape_cast %9 : vector<64x16xf32> to vector<1x64x16xf32>
    tpu.vector_store %arg5[%c0_7, %c0_8, %c0_9], %12 {strides = array<i32>} : memref<1x64x16xf32, #tpu.memory_space<vmem>>, vector<1x64x16xf32>,
    return
  }
  func.func @transform_0(%arg0: i32, %arg1: i32) -> (i32, i32, i32) {
    %c0_i32 = arith.constant 0 : i32
    %c0_i32_0 = arith.constant 0 : i32
    return %arg0, %c0_i32, %arg1 : i32, i32, i32
  }
  func.func @transform_1(%arg0: i32, %arg1: i32) -> (i32, i32) {
    %c0_i32 = arith.constant 0 : i32
    %c0_i32_0 = arith.constant 0 : i32
    %c0_i32_1 = arith.constant 0 : i32
    return %c0_i32, %c0_i32_0 : i32, i32
  }
  func.func @transform_2(%arg0: i32, %arg1: i32) -> (i32, i32) {
    %c0_i32 = arith.constant 0 : i32
    %c0_i32_0 = arith.constant 0 : i32
    %c0_i32_1 = arith.constant 0 : i32
    return %c0_i32, %c0_i32_0 : i32, i32
  }
  func.func @transform_3(%arg0: i32, %arg1: i32) -> (i32, i32, i32) {
    %c0_i32 = arith.constant 0 : i32
    %c0_i32_0 = arith.constant 0 : i32
    return %arg0, %c0_i32, %arg1 : i32, i32, i32
  }
}

</mosaic_0001>

<llo_original>
// kernel: tpu_custom_call.1
$region0: #{tpu_custom_call.1}
  #allocation0 [shape = 'u32[]', space=smem, size = 0x4, offset = 0x4, fixed_abs, tag = 'smem constant byte address 0x4 - core index']
  #allocation1 [shape = 'u32[144,128]{1,0:T(1,128)}', space=vmem, size = 0x12000, scoped, tag = 'internal scratch']
  %s0 = inlined_call_operand.vmem [shape: f32[2,32,16], index: 0, kind: input, shape index: {}]
  %s1 = inlined_call_operand.vmem [shape: bf16[64,32], index: 1, kind: input, shape index: {}]
  %s2 = inlined_call_operand.vmem [shape: f32[64,1], index: 2, kind: input, shape index: {}]
  %s3 = inlined_call_operand.vmem [shape: f32[2,64,16], index: 3, kind: output, shape index: {}]
  %s4 = sld [smem:[#allocation0]]
  $region45: #{tpu_custom_call.1} parent=0
    _
  %s6 = ssub.s32 1, %s4
  %s7 = scalar_select 0, %s6, %s4
  loop: start=0, step=1, limit=4
  $region2: #{tpu_custom_call.1} parent=0 // loop_pre_header
    _
  $region3: #{tpu_custom_call.1} parent=0 // loop_header
    %s9 = sphi 0, %s13
    %p10 = scmp.ge.s32.totalorder %s9, 4
    %s16 = sphi 0, %s28
    %s17 = sphi 0, %s24
    %s18 = sphi 0, %s16
    %s19 = sphi 0, %s17
    %s20 = sphi 0, %s18
    %s21 = sphi 0, %s19
    %s33 = sphi 0, %s35
    %s36 = sphi 0, %s33
    %s37 = sphi 0, %s36
    %s53 = sphi 0, %s37
    %s57 = sphi 0, %s57
    %s59 = sphi 0, %s57
    %s60 = sphi 0, %s59
    %s74 = sphi 0, %s60
    %s78 = sphi 0, %s78
    %s80 = sphi 0, %s78
    %s81 = sphi 0, %s80
    %s95 = sphi 0, %s81
    %s103 = sphi 0, %s105
    %s106 = sphi 0, %s103
    %s107 = sphi 0, %s106
    %s123 = sphi 0, %s107
  $region4: #{tpu_custom_call.1} parent=0 // loop_header_branch
    %12 = sbr.rel (%p10) target = $region8
  $region5: #{tpu_custom_call.1} parent=0 // loop_body
    %s14 = ssub.s32 %s9, 1
    %s15 = ssub.s32 %s9, 2
    %s22 = sadd.s32 1, %s17
    %p23 = scmp.ge.s32.totalorder %s22, 1
    %s24 = scalar_select %p23, 0, %s22
    %s25 = sadd.s32 1, %s16
    %s26 = scalar_select %p23, %s25, %s16
    %p27 = scmp.ge.s32.totalorder %s26, 2
    %s28 = scalar_select %p27, 0, %s26
    %s29 = ssub.s32 %s16, %s28
    %s30 = ssub.s32 %s17, %s24
    %s31 = sor.u32 %s29, %s30
    %p32 = scmp.eq.s32.totalorder %s31, 0
    %s34 = sadd.s32 %s33, 1
    %s35 = scalar_select %p32, %s33, %s34
    %p38 = pneg %p32
    %p39 = scmp.eq.s32.totalorder %s9, 1
    %p40 = por %p38, %p39
    %p41 = scmp.ne.s32.totalorder %s33, %s36
    %p42 = scmp.eq.s32.totalorder %s9, 0
    %p43 = por %p41, %p42
    %p44 = scmp.ne.s32.totalorder %s33, %s36
    %p45 = scmp.eq.s32.totalorder %s14, 1
    %p46 = por %p44, %p45
    %p47 = scmp.ne.s32.totalorder %s36, %s37
    %p48 = scmp.eq.s32.totalorder %s14, 0
    %p49 = por %p47, %p48
    %p50 = scmp.ne.s32.totalorder %s36, %s37
    %p51 = scmp.eq.s32.totalorder %s15, 1
    %p52 = por %p50, %p51
    %p54 = scmp.ne.s32.totalorder %s37, %s53
    %p55 = scmp.eq.s32.totalorder %s15, 0
    %p56 = por %p54, %p55
    %s58 = sadd.s32 %s57, 1
    %p61 = scmp.eq.s32.totalorder %s9, 1
    %p62 = scmp.ne.s32.totalorder %s57, %s59
    %p63 = scmp.eq.s32.totalorder %s9, 0
    %p64 = por %p62, %p63
    %p65 = scmp.ne.s32.totalorder %s57, %s59
    %p66 = scmp.eq.s32.totalorder %s14, 1
    %p67 = por %p65, %p66
    %p68 = scmp.ne.s32.totalorder %s59, %s60
    %p69 = scmp.eq.s32.totalorder %s14, 0
    %p70 = por %p68, %p69
    %p71 = scmp.ne.s32.totalorder %s59, %s60
    %p72 = scmp.eq.s32.totalorder %s15, 1
    %p73 = por %p71, %p72
    %p75 = scmp.ne.s32.totalorder %s60, %s74
    %p76 = scmp.eq.s32.totalorder %s15, 0
    %p77 = por %p75, %p76
    %s79 = sadd.s32 %s78, 1
    %p82 = scmp.eq.s32.totalorder %s9, 1
    %p83 = scmp.ne.s32.totalorder %s78, %s80
    %p84 = scmp.eq.s32.totalorder %s9, 0
    %p85 = por %p83, %p84
    %p86 = scmp.ne.s32.totalorder %s78, %s80
    %p87 = scmp.eq.s32.totalorder %s14, 1
    %p88 = por %p86, %p87
    %p89 = scmp.ne.s32.totalorder %s80, %s81
    %p90 = scmp.eq.s32.totalorder %s14, 0
    %p91 = por %p89, %p90
    %p92 = scmp.ne.s32.totalorder %s80, %s81
    %p93 = scmp.eq.s32.totalorder %s15, 1
    %p94 = por %p92, %p93
    %p96 = scmp.ne.s32.totalorder %s81, %s95
    %p97 = scmp.eq.s32.totalorder %s15, 0
    %p98 = por %p96, %p97
    %s99 = ssub.s32 %s16, %s28
    %s100 = ssub.s32 %s17, %s24
    %s101 = sor.u32 %s99, %s100
    %p102 = scmp.eq.s32.totalorder %s101, 0
    %s104 = sadd.s32 %s103, 1
    %s105 = scalar_select %p102, %s103, %s104
    %p108 = pneg %p102
    %p109 = scmp.eq.s32.totalorder %s9, 1
    %p110 = por %p108, %p109
    %p111 = scmp.ne.s32.totalorder %s103, %s106
    %p112 = scmp.eq.s32.totalorder %s9, 0
    %p113 = por %p111, %p112
    %p114 = scmp.ne.s32.totalorder %s103, %s106
    %p115 = scmp.eq.s32.totalorder %s14, 1
    %p116 = por %p114, %p115
    %p117 = scmp.ne.s32.totalorder %s106, %s107
    %p118 = scmp.eq.s32.totalorder %s14, 0
    %p119 = por %p117, %p118
    %p120 = scmp.ne.s32.totalorder %s106, %s107
    %p121 = scmp.eq.s32.totalorder %s15, 1
    %p122 = por %p120, %p121
    %p124 = scmp.ne.s32.totalorder %s107, %s123
    %p125 = scmp.eq.s32.totalorder %s15, 0
    %p126 = por %p124, %p125
    %p127 = scmp.le.s32.totalorder 1, %s9
    %p128 = scmp.lt.s32.totalorder %s9, 3
    %p129 = pnand %p127, %p128
    %p130 = pneg %p129
    // Predicated region
    $region9: #{tpu_custom_call.1} parent=5 // pred_check
      _
    $region10: #{tpu_custom_call.1} parent=5 // pred_check_branch
      %132 = sbr.rel (%p129) target = $region12
    $region11: #{tpu_custom_call.1} parent=5 // pred_region
      %s133 = ssub.s32 %s9, 1
      // Predicated region
      $region13: #{tpu_custom_call.1} parent=11 // pred_check
        %p134 = pneg %p70
      $region14: #{tpu_custom_call.1} parent=11 // pred_check_branch
        %136 = sbr.rel (%p134) target = $region16
      $region15: #{tpu_custom_call.1} parent=11 // pred_region
        _
      $region16: #{tpu_custom_call.1} parent=11 // pred_fallthru
        _
      // Predicated region
      $region17: #{tpu_custom_call.1} parent=11 // pred_check
        %p137 = pneg %p91
      $region18: #{tpu_custom_call.1} parent=11 // pred_check_branch
        %139 = sbr.rel (%p137) target = $region20
      $region19: #{tpu_custom_call.1} parent=11 // pred_region
        _
      $region20: #{tpu_custom_call.1} parent=11 // pred_fallthru
        _
    $region12: #{tpu_custom_call.1} parent=5 // pred_fallthru
      _
    %p140 = scmp.lt.s32.totalorder %s9, 2
    // Predicated region
    $region21: #{tpu_custom_call.1} parent=5 // pred_check
      %p141 = pneg %p140
    $region22: #{tpu_custom_call.1} parent=5 // pred_check_branch
      %143 = sbr.rel (%p141) target = $region24
    $region23: #{tpu_custom_call.1} parent=5 // pred_region
      // Predicated region
      $region25: #{tpu_custom_call.1} parent=23 // pred_check
        %p144 = pneg %p43
      $region26: #{tpu_custom_call.1} parent=23 // pred_check_branch
        %146 = sbr.rel (%p144) target = $region28
      $region27: #{tpu_custom_call.1} parent=23 // pred_region
        %p147 = scmp.lt.s32.totalorder %s16, 1
        %s148 = scalar_select %p147, %s16, 1
        %p149 = scmp.lt.s32.totalorder %s17, 0
        %s150 = scalar_select %p149, %s17, 0
        %s151 = smul.addr %s148, 4
        %s152 = sadd.s32 %s150, %s151
        %s153 = smul.addr %s152, 8
        %s154 = scalar_lea.vmem %s0, %s153
      $region28: #{tpu_custom_call.1} parent=23 // pred_fallthru
        _
    $region24: #{tpu_custom_call.1} parent=5 // pred_fallthru
      _
    %p155 = scmp.le.s32.totalorder 1, %s9
    %p156 = scmp.lt.s32.totalorder %s9, 3
    %p157 = pnand %p155, %p156
    %p158 = pneg %p157
    // Predicated region
    $region29: #{tpu_custom_call.1} parent=5 // pred_check
      _
    $region30: #{tpu_custom_call.1} parent=5 // pred_check_branch
      %160 = sbr.rel (%p157) target = $region32
    $region31: #{tpu_custom_call.1} parent=5 // pred_region
      %s161 = ssub.s32 %s9, 1
      %p162 = scmp.lt.s32.totalorder %s18, 1
      %s163 = scalar_select %p162, %s18, 1
      %p164 = scmp.lt.s32.totalorder %s19, 0
      %s165 = scalar_select %p164, %s19, 0
      %s166 = smul.addr %s163, 4
      %s167 = sadd.s32 %s165, %s166
      %s168 = smul.addr %s167, 8
      %s169 = scalar_lea.vmem %s0, %s168
      %p170 = pneg %p49
      %p171 = pneg %p46
      %p172 = pneg %p70
      %p173 = pneg %p67
      %p174 = pneg %p91
      %p175 = pneg %p88
      %p176 = pneg %p119
      %p177 = pneg %p116
      %p178 = scmp.lt.s32.totalorder %s18, 1
      %s179 = scalar_select %p178, %s18, 1
      %p180 = scmp.lt.s32.totalorder %s19, 0
      %s181 = scalar_select %p180, %s19, 0
      %s182 = smul.addr %s179, 8
      %s183 = sadd.s32 %s181, %s182
      %s184 = smul.addr %s183, 8
      %s185 = scalar_lea.vmem %s3, %s184
      %p186 = scmp.lt.s32.totalorder %s18, 1
      %s187 = scalar_select %p186, %s18, 1
      %p188 = scmp.lt.s32.totalorder %s19, 0
      %s189 = scalar_select %p188, %s19, 0
      %s190 = smul.addr %s187, 4
      %s191 = sadd.s32 %s189, %s190
      %s192 = smul.addr %s191, 8
      %s193 = scalar_lea.vmem %s0, %s192
      %p194 = scmp.lt.s32.totalorder %s18, 1
      %s195 = scalar_select %p194, %s18, 1
      %p196 = scmp.lt.s32.totalorder %s19, 0
      %s197 = scalar_select %p196, %s19, 0
      %s198 = smul.addr %s195, 8
      %s199 = sadd.s32 %s197, %s198
      %s200 = smul.addr %s199, 8
      %s201 = scalar_lea.vmem %s3, %s200
      %v203 = vld [vmem:[%s193] sm:$0xff]
      %v204 = vld [vmem:[%s193 + $0x8] sm:$0xff]
      %v205 = vld [vmem:[%s193 + $0x10] sm:$0xff]
      %v206 = vld [vmem:[%s193 + $0x18] sm:$0xff]
      %v207 = vpack.c.bf16 %v204, %v203
      %v208 = vpack.c.bf16 %v206, %v205
      %v209 = vld [vmem:[%s1] sm:$0xf]
      %v210 = vld [vmem:[%s1 + $0x4] sm:$0xf]
      %v211 = vld [vmem:[%s1 + $0x8] sm:$0xf]
      %v212 = vld [vmem:[%s1 + $0xc] sm:$0xf]
      %v213 = vld [vmem:[%s1 + $0x10] sm:$0xf]
      %v214 = vld [vmem:[%s1 + $0x14] sm:$0xf]
      %v215 = vld [vmem:[%s1 + $0x18] sm:$0xf]
      %v216 = vld [vmem:[%s1 + $0x1c] sm:$0xf]
      %v217 = vld [vmem:[%s2] sm:$0xff]
      %v218 = vld [vmem:[%s2 + $0x8] sm:$0xff]
      %v219 = vld [vmem:[%s2 + $0x10] sm:$0xff]
      %v220 = vld [vmem:[%s2 + $0x18] sm:$0xff]
      %v221 = vld [vmem:[%s2 + $0x20] sm:$0xff]
      %v222 = vld [vmem:[%s2 + $0x28] sm:$0xff]
      %v223 = vld [vmem:[%s2 + $0x30] sm:$0xff]
      %v224 = vld [vmem:[%s2 + $0x38] sm:$0xff]
      %226 = vset.pattern.permute.xlu0 0
      %227 = vperm.xlu0 %226, %v217
      %v228 = vpop.permute.xlu0 %227
      %231 = vset.pattern.permute.xlu0 0
      %232 = vperm.xlu0 %231, %v218
      %v233 = vpop.permute.xlu0 %232
      %236 = vset.pattern.permute.xlu0 0
      %237 = vperm.xlu0 %236, %v219
      %v238 = vpop.permute.xlu0 %237
      %241 = vset.pattern.permute.xlu0 0
      %242 = vperm.xlu0 %241, %v220
      %v243 = vpop.permute.xlu0 %242
      %246 = vset.pattern.permute.xlu0 0
      %247 = vperm.xlu0 %246, %v221
      %v248 = vpop.permute.xlu0 %247
      %251 = vset.pattern.permute.xlu0 0
      %252 = vperm.xlu0 %251, %v222
      %v253 = vpop.permute.xlu0 %252
      %256 = vset.pattern.permute.xlu0 0
      %257 = vperm.xlu0 %256, %v223
      %v258 = vpop.permute.xlu0 %257
      %261 = vset.pattern.permute.xlu0 0
      %262 = vperm.xlu0 %261, %v224
      %v263 = vpop.permute.xlu0 %262
      %v273 = vunpack.c.l.b16 %v209
      %v274 = vunpack.c.l.b16 %v210
      %v275 = vunpack.c.l.b16 %v211
      %v276 = vunpack.c.l.b16 %v212
      %v277 = vunpack.c.l.b16 %v213
      %v278 = vunpack.c.l.b16 %v214
      %v279 = vunpack.c.l.b16 %v215
      %v280 = vunpack.c.l.b16 %v216
      %v281 = vpack.c.b16 %v274, %v273
      %v282 = vpack.c.b16 %v276, %v275
      %v283 = vpack.c.b16 %v278, %v277
      %v284 = vpack.c.b16 %v280, %v279
      %vm285 = vcmask 261120
      %v287 = vsel %vm285, %v281, 0
      %v290 = vsel %vm285, %v282, 0
      %v293 = vsel %vm285, %v283, 0
      %v296 = vsel %vm285, %v284, 0
      %298 = vmatprep.subr.bf16.mxu0 0
      %299 = vmatpush1.bf16.msra.mxu0 %v207
      %300 = vmatprep.subr.bf16.mxu0 0
      %301 = vmatpush1.bf16.msra.mxu0 %v208
      %302 = vmatprep.subr.bf16.mxu0 0
      %303 = vmatpush1.bf16.msra.mxu0 0
      %304 = vmatprep.subr.bf16.mxu0 0
      %305 = vmatpush1.bf16.msra.mxu0 0
      %306 = vmatprep.subr.bf16.mxu0 0
      %307 = vmatpush1.bf16.msra.mxu0 0
      %308 = vmatprep.subr.bf16.mxu0 0
      %309 = vmatpush1.bf16.msra.mxu0 0
      %310 = vmatprep.subr.bf16.mxu0 0
      %311 = vmatpush1.bf16.msra.mxu0 0
      %312 = vmatprep.subr.bf16.mxu0 0
      %313 = vmatpush1.bf16.msra.mxu0 0
      %314 = vmatprep.subr.bf16.mxu0 0
      %315 = vmatpush1.bf16.msra.mxu0 0
      %316 = vmatprep.subr.bf16.mxu0 0
      %317 = vmatpush1.bf16.msra.mxu0 0
      %318 = vmatprep.subr.bf16.mxu0 0
      %319 = vmatpush1.bf16.msra.mxu0 0
      %320 = vmatprep.subr.bf16.mxu0 0
      %321 = vmatpush1.bf16.msra.mxu0 0
      %322 = vmatprep.subr.bf16.mxu0 0
      %323 = vmatpush1.bf16.msra.mxu0 0
      %324 = vmatprep.subr.bf16.mxu0 0
      %325 = vmatpush1.bf16.msra.mxu0 0
      %326 = vmatprep.subr.bf16.mxu0 0
      %327 = vmatpush1.bf16.msra.mxu0 0
      %328 = vmatprep.subr.bf16.mxu0 0
      %329 = vmatpush1.bf16.msra.mxu0 0
      %330 = vmatprep.mubr.bf16.mxu0 0
      %331 = vmatmul.mubr.bf16.gmra.mrb[0].mxu0 %v287
      %v332 = vpop.f32.mrb[0].mxu0
      %v333 = vadd.f32 %v228, %v332
      %v334 = vpop.f32.mrb[0].mxu0
      %v335 = vpop.f32.mrb[0].mxu0
      %v336 = vadd.f32 %v233, %v335
      %v337 = vpop.f32.mrb[0].mxu0
      %338 = vmatprep.mubr.bf16.mxu0 0
      %339 = vmatmul.mubr.bf16.gmra.mrb[0].mxu0 %v290
      %v340 = vpop.f32.mrb[0].mxu0
      %v341 = vadd.f32 %v238, %v340
      %v342 = vpop.f32.mrb[0].mxu0
      %v343 = vpop.f32.mrb[0].mxu0
      %v344 = vadd.f32 %v243, %v343
      %v345 = vpop.f32.mrb[0].mxu0
      %346 = vmatprep.mubr.bf16.mxu0 0
      %347 = vmatmul.mubr.bf16.gmra.mrb[0].mxu0 %v293
      %v348 = vpop.f32.mrb[0].mxu0
      %v349 = vadd.f32 %v248, %v348
      %v350 = vpop.f32.mrb[0].mxu0
      %v351 = vpop.f32.mrb[0].mxu0
      %v352 = vadd.f32 %v253, %v351
      %v353 = vpop.f32.mrb[0].mxu0
      %354 = vmatprep.mubr.bf16.mxu0 0
      %355 = vmatmul.mubr.bf16.gmra.mrb[0].mxu0 %v296
      %v356 = vpop.f32.mrb[0].mxu0
      %v357 = vadd.f32 %v258, %v356
      %v358 = vpop.f32.mrb[0].mxu0
      %v359 = vpop.f32.mrb[0].mxu0
      %v360 = vadd.f32 %v263, %v359
      %v361 = vpop.f32.mrb[0].mxu0
      %362 = vdwg.mxu0
      %v363 = vmax.f32 %v333, 0.0
      %v364 = vmax.f32 %v336, 0.0
      %v365 = vmax.f32 %v341, 0.0
      %v366 = vmax.f32 %v344, 0.0
      %v367 = vmax.f32 %v349, 0.0
      %v368 = vmax.f32 %v352, 0.0
      %v369 = vmax.f32 %v357, 0.0
      %v370 = vmax.f32 %v360, 0.0
      %vm371 = vcmask 130048
      %372 = vst.msk [vmem:[%s201] sm:$0xff] %vm371, %v363
      %373 = vst.msk [vmem:[%s201 + $0x8] sm:$0xff] %vm371, %v364
      %374 = vst.msk [vmem:[%s201 + $0x10] sm:$0xff] %vm371, %v365
      %375 = vst.msk [vmem:[%s201 + $0x18] sm:$0xff] %vm371, %v366
      %376 = vst.msk [vmem:[%s201 + $0x20] sm:$0xff] %vm371, %v367
      %377 = vst.msk [vmem:[%s201 + $0x28] sm:$0xff] %vm371, %v368
      %378 = vst.msk [vmem:[%s201 + $0x30] sm:$0xff] %vm371, %v369
      %379 = vst.msk [vmem:[%s201 + $0x38] sm:$0xff] %vm371, %v370
      %p380 = scmp.lt.s32.totalorder %s18, 1
      %s381 = scalar_select %p380, %s18, 1
      %p382 = scmp.lt.s32.totalorder %s19, 0
      %s383 = scalar_select %p382, %s19, 0
      %s384 = smul.addr %s381, 8
      %s385 = sadd.s32 %s383, %s384
      %s386 = smul.addr %s385, 8
      %s387 = scalar_lea.vmem %s3, %s386
      // Predicated region
      $region33: #{tpu_custom_call.1} parent=31 // pred_check
        %p388 = pneg %p116
      $region34: #{tpu_custom_call.1} parent=31 // pred_check_branch
        %390 = sbr.rel (%p388) target = $region36
      $region35: #{tpu_custom_call.1} parent=31 // pred_region
        _
      $region36: #{tpu_custom_call.1} parent=31 // pred_fallthru
        _
    $region32: #{tpu_custom_call.1} parent=5 // pred_fallthru
      _
    %p391 = scmp.le.s32.totalorder 2, %s9
    // Predicated region
    $region37: #{tpu_custom_call.1} parent=5 // pred_check
      %p392 = pneg %p391
    $region38: #{tpu_custom_call.1} parent=5 // pred_check_branch
      %394 = sbr.rel (%p392) target = $region40
    $region39: #{tpu_custom_call.1} parent=5 // pred_region
      %s395 = ssub.s32 %s9, 2
      // Predicated region
      $region41: #{tpu_custom_call.1} parent=39 // pred_check
        %p396 = pneg %p122
      $region42: #{tpu_custom_call.1} parent=39 // pred_check_branch
        %398 = sbr.rel (%p396) target = $region44
      $region43: #{tpu_custom_call.1} parent=39 // pred_region
        %p399 = scmp.lt.s32.totalorder %s20, 1
        %s400 = scalar_select %p399, %s20, 1
        %p401 = scmp.lt.s32.totalorder %s21, 0
        %s402 = scalar_select %p401, %s21, 0
        %s403 = smul.addr %s400, 8
        %s404 = sadd.s32 %s402, %s403
        %s405 = smul.addr %s404, 8
        %s406 = scalar_lea.vmem %s3, %s405
      $region44: #{tpu_custom_call.1} parent=39 // pred_fallthru
        _
    $region40: #{tpu_custom_call.1} parent=5 // pred_fallthru
      _
  $region6: #{tpu_custom_call.1} parent=0 // loop_footer
    %s13 = sadd.s32 1, %s9
  $region7: #{tpu_custom_call.1} parent=0 // loop_footer_branch
    %8 = sbr.rel target = $region3
  $region8: #{tpu_custom_call.1} parent=0 // loop_exit
    _

</llo_original>
